<compile_context>
chip_gen: v7x
topology: tpu7x:2x2x1
jax: 0.10.0
libtpu: 0.0.40
codegen_flags: <defaults>
</compile_context>

<pallas_src>
import jax
import jax.numpy as jnp
from jax.experimental import pallas as pl
from jax.experimental.pallas import tpu as pltpu

_EPS = 1e-5


def _jdasa_kernel(act_ref, wslab_ref, vec_ref, out_ref):
    # Static dims derived from ref shapes (known at trace time).
    three_b, kr = act_ref.shape          # act: [3B, kr] (nf0 | nf1 | sf rows)
    b = three_b // 3
    n = wslab_ref.shape[1]               # fused feature lanes = hidden + s_dim

    # ---- packed per-row parameter slab (one vreg tile, no lane shifts) ----
    vec = vec_ref[...]                   # (8, 128)
    b1_row = vec[0:1, :n]                # b1 at lanes [0, hidden)
    gam = vec[1:2, :n]                   # g2 at [0, h2), g1 at [hidden, hidden+s_dim)
    bet = vec[2:3, :n]                   # be2 / be1 at matching offsets
    whead = vec[3:4, :n]                 # woh / wox at matching offsets
    bo = vec[4:5, 0:1]                   # b_out scalar

    # ---- packed weight slab: stage-1 block-diag weight over padded w2 ----
    w1f = wslab_ref[0:kr, :]             # [kr, n]  = [[w1, 0], [0, w_sg]]
    w2p = wslab_ref[kr:kr + n, :]        # [n,  n]  = w2 in rows [0,hidden) x cols [0,h2)

    # ---- stage 1: one fused MXU dot for both branches ---------------------
    fused = jnp.dot(act_ref[...], w1f, preferred_element_type=jnp.float32)  # [3B, n]
    # rows [0, 2B): nf@w1 at lanes [0, hidden), zeros elsewhere
    # rows [2B, 3B): sf@w_sg at lanes [hidden, n), zeros elsewhere  (b_sg cancels in BN)
    hcat = fused[0:2 * b, :] + b1_row
    hprod = hcat[0:b, :] * hcat[b:2 * b, :]          # x[:,0,:] * x[:,1,:]
    x_pre = fused[2 * b:3 * b, :]                    # branch-1 pre-BN, lanes [hidden, n)

    # ---- stage 2: lin2 (b2 cancels in BN) + merge branches ----------------
    z = jnp.dot(hprod, w2p, preferred_element_type=jnp.float32) + x_pre     # [B, n]
    # z lanes: [0, h2) = branch-2 pre-BN, [h2, hidden) = 0, [hidden, n) = branch-1 pre-BN

    # ---- fused training-mode BatchNorm (both BNs at once, one-pass stats) --
    inv_n = 1.0 / b
    s1 = jnp.sum(z, axis=0, keepdims=True)
    s2 = jnp.sum(z * z, axis=0, keepdims=True)
    mu = s1 * inv_n
    var = jnp.maximum(s2 * inv_n - mu * mu, 0.0)     # biased (/N), clamp for safety
    zn = (z - mu) * jax.lax.rsqrt(var + _EPS) * gam + bet
    zn = jnp.maximum(zn, 0.0)
    # dropout(p=0.7) -> identity (see TODO at top)

    # ---- head: lin(concat([x, h], 1)) as VPU mul + lane reduce -------------
    # TODO(synk): lane-dense ([1, B]-style) output store is deferred to the
    #             scaled grid-over-B version; at B=8 the single masked column
    #             store is negligible and the [B, 1] store is known-good.
    out_ref[...] = jnp.sum(zn * whead, axis=-1, keepdims=True) + bo


def jdasa_forward(sf, node_features, params):
    """sf: [B, hops*(hops+2)] f32, node_features: [B, 2, num_features] f32 -> [B, 1]."""
    dt = jnp.float32
    b = sf.shape[0]
    ksf = sf.shape[1]
    f = node_features.shape[-1]
    s_dim = params["w_sg"].shape[1]
    hidden = params["w1"].shape[1]
    h2 = params["w2"].shape[1]
    n = hidden + s_dim                       # fused feature-lane width
    assert n <= 128, "packed param slab assumes fused feature width <= 128 lanes"
    kr = ((f + ksf + 7) // 8) * 8            # stage-1 contraction dim, 8-aligned

    # --- fused activation block [3B, kr]: nf0 | nf1 | sf (block layout) -----
    # TODO(synk): at realistic B keep this layout at the producer (or pass the
    #             halves as separate operands) instead of re-packing via HBM.
    act = jnp.zeros((3 * b, kr), dt)
    act = act.at[0:b, 0:f].set(node_features[:, 0, :].astype(dt))
    act = act.at[b:2 * b, 0:f].set(node_features[:, 1, :].astype(dt))
    act = act.at[2 * b:3 * b, f:f + ksf].set(sf.astype(dt))

    # --- fused weight slab [kr + n, n] ---------------------------------------
    wslab = jnp.zeros((kr + n, n), dt)
    wslab = wslab.at[0:f, 0:hidden].set(params["w1"].astype(dt))                 # w1 block
    wslab = wslab.at[f:f + ksf, hidden:hidden + s_dim].set(params["w_sg"].astype(dt))  # w_sg block
    wslab = wslab.at[kr:kr + hidden, 0:h2].set(params["w2"].astype(dt))          # padded w2

    # --- packed [8, 128] parameter slab, lane offsets matching z's layout ---
    w_out = params["w_out"]                  # [s_dim + h2, 1]
    wox = w_out[:s_dim, 0]                   # head weights for branch-1 (x)
    woh = w_out[s_dim:, 0]                   # head weights for branch-2 (h)
    vec = jnp.zeros((8, 128), dt)
    vec = vec.at[0, 0:hidden].set(params["b1"].astype(dt))
    vec = vec.at[1, 0:h2].set(params["g2"].astype(dt))
    vec = vec.at[1, hidden:hidden + s_dim].set(params["g1"].astype(dt))
    vec = vec.at[2, 0:h2].set(params["be2"].astype(dt))
    vec = vec.at[2, hidden:hidden + s_dim].set(params["be1"].astype(dt))
    vec = vec.at[3, 0:h2].set(woh.astype(dt))
    vec = vec.at[3, hidden:hidden + s_dim].set(wox.astype(dt))
    vec = vec.at[4, 0].set(params["b_out"].astype(dt)[0])

    vmem = pl.BlockSpec(memory_space=pltpu.MemorySpace.VMEM)
    return pl.pallas_call(
        _jdasa_kernel,
        out_shape=jax.ShapeDtypeStruct((b, 1), jnp.float32),
        in_specs=[vmem, vmem, vmem],
        out_specs=vmem,
    )(act, wslab, vec)


def _init_params(key, sf_in, num_features, s_dim, hidden_dim):
    ks = jax.random.split(key, 4)
    h2 = hidden_dim // 2

    def lin(k, fin, fout):
        bound = 1.0 / (fin ** 0.5)
        kw, kb = jax.random.split(k)
        w = jax.random.uniform(kw, (fin, fout), jnp.float32, -bound, bound)
        bb = jax.random.uniform(kb, (fout,), jnp.float32, -bound, bound)
        return w, bb

    w_sg, b_sg = lin(ks[0], sf_in, s_dim)
    w1, b1 = lin(ks[1], num_features, hidden_dim)
    w2, b2 = lin(ks[2], hidden_dim, h2)
    w_out, b_out = lin(ks[3], s_dim + h2, 1)
    return {
        "w_sg": w_sg, "b_sg": b_sg,
        "g1": jnp.ones((s_dim,), jnp.float32), "be1": jnp.zeros((s_dim,), jnp.float32),
        "w1": w1, "b1": b1,
        "w2": w2, "b2": b2,
        "g2": jnp.ones((h2,), jnp.float32), "be2": jnp.zeros((h2,), jnp.float32),
        "w_out": w_out, "b_out": b_out,
    }


def _reference(sf, nf, p):
    # Pure-JAX reference matching the PyTorch forward (training-mode BN with
    # batch stats, dropout as identity). Biases kept here to prove they cancel.
    x = sf @ p["w_sg"] + p["b_sg"]
    mu, var = x.mean(0), x.var(0)
    x = (x - mu) / jnp.sqrt(var + _EPS) * p["g1"] + p["be1"]
    x = jnp.maximum(x, 0.0)
    h = nf @ p["w1"] + p["b1"]
    h = h[:, 0, :] * h[:, 1, :]
    h = h @ p["w2"] + p["b2"]
    mu2, var2 = h.mean(0), h.var(0)
    h = (h - mu2) / jnp.sqrt(var2 + _EPS) * p["g2"] + p["be2"]
    h = jnp.maximum(h, 0.0)
    return jnp.concatenate([x, h], axis=1) @ p["w_out"] + p["b_out"]


if __name__ == "__main__":
    # args.hops = 2 -> sf_in = hops*(hops+2) = 8
    # args.s_dim = 16, args.hidden_dim = 32, num_features = 16, batch = 8
    hops, s_dim, hidden_dim, num_features, batch = 2, 16, 32, 16, 8
    sf_in = hops * (hops + 2)

    key = jax.random.PRNGKey(0)
    k_sf, k_nf, k_p = jax.random.split(key, 3)
    sf = jax.random.normal(k_sf, (batch, sf_in), jnp.float32)
    node_features = jax.random.normal(k_nf, (batch, 2, num_features), jnp.float32)
    params = _init_params(k_p, sf_in, num_features, s_dim, hidden_dim)

    out = jdasa_forward(sf, node_features, params)
    out = jax.block_until_ready(out)

    ref = _reference(sf, node_features, params)
    assert out.shape == (batch, 1)
    assert jnp.allclose(out, ref, atol=1e-4, rtol=1e-4)
    print("KERNEL_OK")
</pallas_src>

<mosaic_0001>
module attributes {stable_mosaic.version = 11 : i64} {
  func.func @_jdasa_kernel(%arg0: memref<24x24xf32, #tpu.memory_space<vmem>>, %arg1: memref<72x48xf32, #tpu.memory_space<vmem>>, %arg2: memref<8x128xf32, #tpu.memory_space<vmem>>, %arg3: memref<8x1xf32, #tpu.memory_space<vmem>>) attributes {dimension_semantics = [], scalar_prefetch = 0 : i64, scratch_operands = 0 : i64, tpu.core_type = #tpu.core_type<tc>} {
    %c0 = arith.constant 0 : index
    %c0_0 = arith.constant 0 : index
    %0 = vector.load %arg2[%c0, %c0_0] : memref<8x128xf32, #tpu.memory_space<vmem>>, vector<8x128xf32>
    %1 = vector.extract_strided_slice %0 {offsets = [0, 0], sizes = [1, 48], strides = [1, 1]} : vector<8x128xf32> to vector<1x48xf32>
    %2 = vector.extract_strided_slice %0 {offsets = [1, 0], sizes = [1, 48], strides = [1, 1]} : vector<8x128xf32> to vector<1x48xf32>
    %3 = vector.extract_strided_slice %0 {offsets = [2, 0], sizes = [1, 48], strides = [1, 1]} : vector<8x128xf32> to vector<1x48xf32>
    %4 = vector.extract_strided_slice %0 {offsets = [3, 0], sizes = [1, 48], strides = [1, 1]} : vector<8x128xf32> to vector<1x48xf32>
    %5 = vector.extract_strided_slice %0 {offsets = [4, 0], sizes = [1, 1], strides = [1, 1]} : vector<8x128xf32> to vector<1x1xf32>
    %c0_1 = arith.constant 0 : index
    %c0_2 = arith.constant 0 : index
    %6 = vector.load %arg1[%c0_1, %c0_2] : memref<72x48xf32, #tpu.memory_space<vmem>>, vector<24x48xf32>
    %c24 = arith.constant 24 : index
    %c0_3 = arith.constant 0 : index
    %7 = vector.load %arg1[%c24, %c0_3] : memref<72x48xf32, #tpu.memory_space<vmem>>, vector<48x48xf32>
    %c0_4 = arith.constant 0 : index
    %c0_5 = arith.constant 0 : index
    %8 = vector.load %arg0[%c0_4, %c0_5] : memref<24x24xf32, #tpu.memory_space<vmem>>, vector<24x24xf32>
    %cst = arith.constant dense<0.000000e+00> : vector<24x48xf32>
    %9 = tpu.matmul %8, %6, %cst {dimension_numbers = #tpu.dot_dimension_numbers<[1], [0], [0], [1], [0, 0, 1, 1], [], []>} : vector<24x24xf32>, vector<24x48xf32>, vector<24x48xf32> -> vector<24x48xf32>
    %10 = vector.extract_strided_slice %9 {offsets = [0, 0], sizes = [16, 48], strides = [1, 1]} : vector<24x48xf32> to vector<16x48xf32>
    %11 = vector.broadcast %1 : vector<1x48xf32> to vector<16x48xf32>
    %12 = arith.addf %10, %11 : vector<16x48xf32>
    %13 = vector.extract_strided_slice %12 {offsets = [0, 0], sizes = [8, 48], strides = [1, 1]} : vector<16x48xf32> to vector<8x48xf32>
    %14 = vector.extract_strided_slice %12 {offsets = [8, 0], sizes = [8, 48], strides = [1, 1]} : vector<16x48xf32> to vector<8x48xf32>
    %15 = arith.mulf %13, %14 : vector<8x48xf32>
    %16 = vector.extract_strided_slice %9 {offsets = [16, 0], sizes = [8, 48], strides = [1, 1]} : vector<24x48xf32> to vector<8x48xf32>
    %cst_6 = arith.constant dense<0.000000e+00> : vector<8x48xf32>
    %17 = tpu.matmul %15, %7, %cst_6 {dimension_numbers = #tpu.dot_dimension_numbers<[1], [0], [0], [1], [0, 0, 1, 1], [], []>} : vector<8x48xf32>, vector<48x48xf32>, vector<8x48xf32> -> vector<8x48xf32>
    %18 = arith.addf %17, %16 : vector<8x48xf32>
    %cst_7 = arith.constant dense<0.000000e+00> : vector<48xf32>
    %19 = vector.multi_reduction <add>, %18, %cst_7 [0] : vector<8x48xf32> to vector<48xf32>
    %20 = vector.shape_cast %19 : vector<48xf32> to vector<1x48xf32>
    %21 = arith.mulf %18, %18 : vector<8x48xf32>
    %cst_8 = arith.constant dense<0.000000e+00> : vector<48xf32>
    %22 = vector.multi_reduction <add>, %21, %cst_8 [0] : vector<8x48xf32> to vector<48xf32>
    %23 = vector.shape_cast %22 : vector<48xf32> to vector<1x48xf32>
    %cst_9 = arith.constant 1.250000e-01 : f32
    %24 = vector.broadcast %cst_9 : f32 to vector<1x48xf32>
    %25 = arith.mulf %20, %24 : vector<1x48xf32>
    %cst_10 = arith.constant 1.250000e-01 : f32
    %26 = vector.broadcast %cst_10 : f32 to vector<1x48xf32>
    %27 = arith.mulf %23, %26 : vector<1x48xf32>
    %28 = arith.mulf %25, %25 : vector<1x48xf32>
    %29 = arith.subf %27, %28 : vector<1x48xf32>
    %cst_11 = arith.constant 0.000000e+00 : f32
    %30 = vector.broadcast %cst_11 : f32 to vector<1x48xf32>
    %31 = arith.maximumf %29, %30 : vector<1x48xf32>
    %32 = vector.broadcast %25 : vector<1x48xf32> to vector<8x48xf32>
    %33 = arith.subf %18, %32 : vector<8x48xf32>
    %cst_12 = arith.constant 9.99999974E-6 : f32
    %34 = vector.broadcast %cst_12 : f32 to vector<1x48xf32>
    %35 = arith.addf %31, %34 : vector<1x48xf32>
    %36 = math.rsqrt %35 : vector<1x48xf32>
    %37 = vector.broadcast %36 : vector<1x48xf32> to vector<8x48xf32>
    %38 = arith.mulf %33, %37 : vector<8x48xf32>
    %39 = vector.broadcast %2 : vector<1x48xf32> to vector<8x48xf32>
    %40 = arith.mulf %38, %39 : vector<8x48xf32>
    %41 = vector.broadcast %3 : vector<1x48xf32> to vector<8x48xf32>
    %42 = arith.addf %40, %41 : vector<8x48xf32>
    %cst_13 = arith.constant 0.000000e+00 : f32
    %43 = vector.broadcast %cst_13 : f32 to vector<8x48xf32>
    %44 = arith.maximumf %42, %43 : vector<8x48xf32>
    %45 = vector.broadcast %4 : vector<1x48xf32> to vector<8x48xf32>
    %46 = arith.mulf %44, %45 : vector<8x48xf32>
    %cst_14 = arith.constant dense<0.000000e+00> : vector<8xf32>
    %47 = vector.multi_reduction <add>, %46, %cst_14 [1] : vector<8x48xf32> to vector<8xf32>
    %48 = vector.shape_cast %47 : vector<8xf32> to vector<8x1xf32>
    %49 = vector.broadcast %5 : vector<1x1xf32> to vector<8x1xf32>
    %50 = arith.addf %48, %49 : vector<8x1xf32>
    %c0_15 = arith.constant 0 : index
    %c0_16 = arith.constant 0 : index
    %51 = vector.load %arg3[%c0_15, %c0_16] : memref<8x1xf32, #tpu.memory_space<vmem>>, vector<8x1xf32>
    tpu.vector_store %arg3[%c0_15, %c0_16], %50 {strides = array<i32>} : memref<8x1xf32, #tpu.memory_space<vmem>>, vector<8x1xf32>,
    return
  }
}

</mosaic_0001>

<llo_original>
// kernel: tpu_custom_call.1
$region0: #{tpu_custom_call.1}
  #allocation0 [shape = 'u32[]', space=smem, size = 0x4, offset = 0x4, fixed_abs, tag = 'smem constant byte address 0x4 - core index']
  #allocation1 [shape = 'u32[144,128]{1,0:T(1,128)}', space=vmem, size = 0x12000, scoped, tag = 'internal scratch']
  %s0 = inlined_call_operand.vmem [shape: f32[24,24], index: 0, kind: input, shape index: {}]
  %s1 = inlined_call_operand.vmem [shape: f32[72,48], index: 1, kind: input, shape index: {}]
  %s2 = inlined_call_operand.vmem [shape: f32[8,128], index: 2, kind: input, shape index: {}]
  %s3 = inlined_call_operand.vmem [shape: f32[8,1], index: 3, kind: output, shape index: {}]
  %s4 = sld [smem:[#allocation0]]
  $region22: #{tpu_custom_call.1} parent=0
    _
  %s6 = ssub.s32 1, %s4
  %s7 = scalar_select 0, %s6, %s4
  // Predicated region
  $region2: #{tpu_custom_call.1} parent=0 // pred_check
    _
  $region3: #{tpu_custom_call.1} parent=0 // pred_check_branch
    %9 = sbr.rel (0) target = $region5
  $region4: #{tpu_custom_call.1} parent=0 // pred_region
    _
  $region5: #{tpu_custom_call.1} parent=0 // pred_fallthru
    _
  // Predicated region
  $region6: #{tpu_custom_call.1} parent=0 // pred_check
    _
  $region7: #{tpu_custom_call.1} parent=0 // pred_check_branch
    %11 = sbr.rel (0) target = $region9
  $region8: #{tpu_custom_call.1} parent=0 // pred_region
    _
  $region9: #{tpu_custom_call.1} parent=0 // pred_fallthru
    _
  // Predicated region
  $region10: #{tpu_custom_call.1} parent=0 // pred_check
    _
  $region11: #{tpu_custom_call.1} parent=0 // pred_check_branch
    %13 = sbr.rel (0) target = $region13
  $region12: #{tpu_custom_call.1} parent=0 // pred_region
    _
  $region13: #{tpu_custom_call.1} parent=0 // pred_fallthru
    _
  %v14 = vld [vmem:[%s2] sm:$0xff]
  %v15 = vld [vmem:[%s1] sm:$0xff]
  %v16 = vld [vmem:[%s1 + $0x8] sm:$0xff]
  %v17 = vld [vmem:[%s1 + $0x10] sm:$0xff]
  %v18 = vld [vmem:[%s1 + $0x18] sm:$0xff]
  %v19 = vld [vmem:[%s1 + $0x20] sm:$0xff]
  %v20 = vld [vmem:[%s1 + $0x28] sm:$0xff]
  %v21 = vld [vmem:[%s1 + $0x30] sm:$0xff]
  %v22 = vld [vmem:[%s1 + $0x38] sm:$0xff]
  %v23 = vld [vmem:[%s1 + $0x40] sm:$0xff]
  %v24 = vld [vmem:[%s0] sm:$0xff]
  %v25 = vld [vmem:[%s0 + $0x8] sm:$0xff]
  %v26 = vld [vmem:[%s0 + $0x10] sm:$0xff]
  %vm27 = vcmask 195584
  %v29 = vsel %vm27, %v24, 0
  %v32 = vsel %vm27, %v25, 0
  %v35 = vsel %vm27, %v26, 0
  %37 = vmatprep.subr.mxu0 0.0
  %38 = vmatpush1.msra.mxu0 %v15
  %39 = vmatprep.subr.mxu0 0.0
  %40 = vmatpush1.msra.mxu0 %v16
  %41 = vmatprep.subr.mxu0 0.0
  %42 = vmatpush1.msra.mxu0 %v17
  %43 = vmatprep.subr.mxu0 0.0
  %44 = vmatpush1.msra.mxu0 0.0
  %45 = vmatprep.subr.mxu0 0.0
  %46 = vmatpush1.msra.mxu0 0.0
  %47 = vmatprep.subr.mxu0 0.0
  %48 = vmatpush1.msra.mxu0 0.0
  %49 = vmatprep.subr.mxu0 0.0
  %50 = vmatpush1.msra.mxu0 0.0
  %51 = vmatprep.subr.mxu0 0.0
  %52 = vmatpush1.msra.mxu0 0.0
  %53 = vmatprep.subr.mxu0 0.0
  %54 = vmatpush1.msra.mxu0 0.0
  %55 = vmatprep.subr.mxu0 0.0
  %56 = vmatpush1.msra.mxu0 0.0
  %57 = vmatprep.subr.mxu0 0.0
  %58 = vmatpush1.msra.mxu0 0.0
  %59 = vmatprep.subr.mxu0 0.0
  %60 = vmatpush1.msra.mxu0 0.0
  %61 = vmatprep.subr.mxu0 0.0
  %62 = vmatpush1.msra.mxu0 0.0
  %63 = vmatprep.subr.mxu0 0.0
  %64 = vmatpush1.msra.mxu0 0.0
  %65 = vmatprep.subr.mxu0 0.0
  %66 = vmatpush1.msra.mxu0 0.0
  %67 = vmatprep.subr.mxu0 0.0
  %68 = vmatpush1.msra.mxu0 0.0
  %69 = vmatprep.subr.mxu0 0.0
  %70 = vmatpush1.msra.mxu0 0.0
  %71 = vmatprep.subr.mxu0 0.0
  %72 = vmatpush1.msra.mxu0 0.0
  %73 = vmatprep.subr.mxu0 0.0
  %74 = vmatpush1.msra.mxu0 0.0
  %75 = vmatprep.subr.mxu0 0.0
  %76 = vmatpush1.msra.mxu0 0.0
  %77 = vmatprep.subr.mxu0 0.0
  %78 = vmatpush1.msra.mxu0 0.0
  %79 = vmatprep.subr.mxu0 0.0
  %80 = vmatpush1.msra.mxu0 0.0
  %81 = vmatprep.subr.mxu0 0.0
  %82 = vmatpush1.msra.mxu0 0.0
  %83 = vmatprep.subr.mxu0 0.0
  %84 = vmatpush1.msra.mxu0 0.0
  %85 = vmatprep.subr.mxu0 0.0
  %86 = vmatpush1.msra.mxu0 0.0
  %87 = vmatprep.subr.mxu0 0.0
  %88 = vmatpush1.msra.mxu0 0.0
  %89 = vmatprep.subr.mxu0 0.0
  %90 = vmatpush1.msra.mxu0 0.0
  %91 = vmatprep.subr.mxu0 0.0
  %92 = vmatpush1.msra.mxu0 0.0
  %93 = vmatprep.subr.mxu0 0.0
  %94 = vmatpush1.msra.mxu0 0.0
  %95 = vmatprep.subr.mxu0 0.0
  %96 = vmatpush1.msra.mxu0 0.0
  %97 = vmatprep.subr.mxu0 0.0
  %98 = vmatpush1.msra.mxu0 0.0
  %99 = vmatprep.subr.mxu0 0.0
  %100 = vmatpush1.msra.mxu0 0.0
  %101 = vmatprep.mubr.f32.mxu0 0.0
  %102 = vmatmul.mubr.f32.gmra.mrb[0].mxu0 %v29
  %v103 = vpop.f32.mrb[0].mxu0
  %v104 = vadd.f32 0.0, %v103
  %v105 = vpop.f32.mrb[0].mxu0
  %106 = vmatprep.mubr.f32.mxu0 0.0
  %107 = vmatmul.mubr.f32.gmra.mrb[0].mxu0 %v32
  %v108 = vpop.f32.mrb[0].mxu0
  %v109 = vadd.f32 0.0, %v108
  %v110 = vpop.f32.mrb[0].mxu0
  %111 = vmatprep.mubr.f32.mxu0 0.0
  %112 = vmatmul.mubr.f32.gmra.mrb[0].mxu0 %v35
  %v113 = vpop.f32.mrb[0].mxu0
  %v114 = vadd.f32 0.0, %v113
  %v115 = vpop.f32.mrb[0].mxu0
  %116 = vdwg.mxu0
  %v117 = vlaneseq
  %v118 = vshrl.u32 %v117, 7
  %v119 = vsub.s32 0, %v118
  %v120 = vrot.slane %v14, %v119
  %v121 = vadd.f32 %v104, %v120
  %v122 = vadd.f32 %v109, %v120
  %v123 = vmul.f32 %v121, %v122
  %vm124 = vcmask 392192
  %v126 = vsel %vm124, %v123, 0
  %128 = vmatprep.subr.mxu0 0.0
  %129 = vmatpush1.msra.mxu0 %v18
  %130 = vmatprep.subr.mxu0 0.0
  %131 = vmatpush1.msra.mxu0 %v19
  %132 = vmatprep.subr.mxu0 0.0
  %133 = vmatpush1.msra.mxu0 %v20
  %134 = vmatprep.subr.mxu0 0.0
  %135 = vmatpush1.msra.mxu0 %v21
  %136 = vmatprep.subr.mxu0 0.0
  %137 = vmatpush1.msra.mxu0 %v22
  %138 = vmatprep.subr.mxu0 0.0
  %139 = vmatpush1.msra.mxu0 %v23
  %140 = vmatprep.subr.mxu0 0.0
  %141 = vmatpush1.msra.mxu0 0.0
  %142 = vmatprep.subr.mxu0 0.0
  %143 = vmatpush1.msra.mxu0 0.0
  %144 = vmatprep.subr.mxu0 0.0
  %145 = vmatpush1.msra.mxu0 0.0
  %146 = vmatprep.subr.mxu0 0.0
  %147 = vmatpush1.msra.mxu0 0.0
  %148 = vmatprep.subr.mxu0 0.0
  %149 = vmatpush1.msra.mxu0 0.0
  %150 = vmatprep.subr.mxu0 0.0
  %151 = vmatpush1.msra.mxu0 0.0
  %152 = vmatprep.subr.mxu0 0.0
  %153 = vmatpush1.msra.mxu0 0.0
  %154 = vmatprep.subr.mxu0 0.0
  %155 = vmatpush1.msra.mxu0 0.0
  %156 = vmatprep.subr.mxu0 0.0
  %157 = vmatpush1.msra.mxu0 0.0
  %158 = vmatprep.subr.mxu0 0.0
  %159 = vmatpush1.msra.mxu0 0.0
  %160 = vmatprep.subr.mxu0 0.0
  %161 = vmatpush1.msra.mxu0 0.0
  %162 = vmatprep.subr.mxu0 0.0
  %163 = vmatpush1.msra.mxu0 0.0
  %164 = vmatprep.subr.mxu0 0.0
  %165 = vmatpush1.msra.mxu0 0.0
  %166 = vmatprep.subr.mxu0 0.0
  %167 = vmatpush1.msra.mxu0 0.0
  %168 = vmatprep.subr.mxu0 0.0
  %169 = vmatpush1.msra.mxu0 0.0
  %170 = vmatprep.subr.mxu0 0.0
  %171 = vmatpush1.msra.mxu0 0.0
  %172 = vmatprep.subr.mxu0 0.0
  %173 = vmatpush1.msra.mxu0 0.0
  %174 = vmatprep.subr.mxu0 0.0
  %175 = vmatpush1.msra.mxu0 0.0
  %176 = vmatprep.subr.mxu0 0.0
  %177 = vmatpush1.msra.mxu0 0.0
  %178 = vmatprep.subr.mxu0 0.0
  %179 = vmatpush1.msra.mxu0 0.0
  %180 = vmatprep.subr.mxu0 0.0
  %181 = vmatpush1.msra.mxu0 0.0
  %182 = vmatprep.subr.mxu0 0.0
  %183 = vmatpush1.msra.mxu0 0.0
  %184 = vmatprep.subr.mxu0 0.0
  %185 = vmatpush1.msra.mxu0 0.0
  %186 = vmatprep.subr.mxu0 0.0
  %187 = vmatpush1.msra.mxu0 0.0
  %188 = vmatprep.subr.mxu0 0.0
  %189 = vmatpush1.msra.mxu0 0.0
  %190 = vmatprep.subr.mxu0 0.0
  %191 = vmatpush1.msra.mxu0 0.0
  %192 = vmatprep.mubr.f32.mxu0 0.0
  %193 = vmatmul.mubr.f32.gmra.mrb[0].mxu0 %v126
  %v194 = vpop.f32.mrb[0].mxu0
  %v195 = vadd.f32 %v114, %v194
  %v196 = vpop.f32.mrb[0].mxu0
  %197 = vdwg.mxu0
  %v198 = vsel %vm124, %v195, 0.0
  %v199 = vrot.slane %v198, 4
  %v200 = vadd.f32 %v198, %v199
  %v201 = vrot.slane %v200, 2
  %v202 = vadd.f32 %v200, %v201
  %v203 = vrot.slane %v202, 1
  %v204 = vadd.f32 %v202, %v203
  %v205 = vmul.f32 %v195, %v195
  %v206 = vsel %vm124, %v205, 0.0
  %v207 = vrot.slane %v206, 4
  %v208 = vadd.f32 %v206, %v207
  %v209 = vrot.slane %v208, 2
  %v210 = vadd.f32 %v208, %v209
  %v211 = vrot.slane %v210, 1
  %v212 = vadd.f32 %v210, %v211
  %v213 = vmul.f32 %v204, 0.125
  %v214 = vmul.f32 %v212, 0.125
  %v215 = vmul.f32 %v213, %v213
  %v216 = vsub.f32 %v214, %v215
  %v217 = vmax.f32 %v216, 0.0
  %v218 = vsub.f32 %v195, %v213
  %v219 = vadd.f32 %v217, 1e-05
  %v220 = vrsqrt.pop %v219
  %v221 = vmul.f32 %v218, %v220
  %v222 = vlaneseq
  %v223 = vshrl.u32 %v222, 7
  %v224 = vsub.s32 1, %v223
  %v225 = vrot.slane %v14, %v224
  %v226 = vmul.f32 %v221, %v225
  %v227 = vlaneseq
  %v228 = vshrl.u32 %v227, 7
  %v229 = vsub.s32 2, %v228
  %v230 = vrot.slane %v14, %v229
  %v231 = vadd.f32 %v226, %v230
  %v232 = vmax.f32 %v231, 0.0
  %v233 = vlaneseq
  %v234 = vshrl.u32 %v233, 7
  %v235 = vsub.s32 3, %v234
  %v236 = vrot.slane %v14, %v235
  %v237 = vmul.f32 %v232, %v236
  %v238 = vsel %vm124, %v237, 0.0
  %239 = vadd.xlane.f32.xlu0 %v238
  %v240 = vpop.xlane.xlu0 %239
  %v241 = vlaneseq
  %v242 = vshrl.u32 %v241, 7
  %v243 = vsub.s32 4, %v242
  %v244 = vrot.slane %v14, %v243
  %v245 = vadd.f32 %v240, %v244
  %vm246 = vcmask 7168
  %247 = vst.msk [vmem:[%s3] sm:$0xff] %vm246, %v245
  // Predicated region
  $region14: #{tpu_custom_call.1} parent=0 // pred_check
    _
  $region15: #{tpu_custom_call.1} parent=0 // pred_check_branch
    %249 = sbr.rel (0) target = $region17
  $region16: #{tpu_custom_call.1} parent=0 // pred_region
    _
  $region17: #{tpu_custom_call.1} parent=0 // pred_fallthru
    _
  // Predicated region
  $region18: #{tpu_custom_call.1} parent=0 // pred_check
    _
  $region19: #{tpu_custom_call.1} parent=0 // pred_check_branch
    %251 = sbr.rel (0) target = $region21
  $region20: #{tpu_custom_call.1} parent=0 // pred_region
    _
  $region21: #{tpu_custom_call.1} parent=0 // pred_fallthru
    _

</llo_original>
